<compile_context>
chip_gen: v7x
topology: tpu7x:2x2x1
jax: 0.10.0
libtpu: 0.0.40
codegen_flags: <defaults>
</compile_context>

<pallas_src>
import functools

import jax
import jax.numpy as jnp
from jax.experimental import pallas as pl
from jax.experimental.pallas import tpu as pltpu


def kl_ce_kernel(pm_ref, pa_ref, lbl_ref, out_ref, *, n_pixels):
    """Fused CE + KL ("variance") partial-sum accumulation for one pixel tile.

    Ref shapes (leading batch dim squeezed by the BlockSpec):
      pm_ref : (C, TP)  main logits
      pa_ref : (C, TP)  aux  logits
      lbl_ref: (1, TP)  integer class ids
      out_ref: (3, TP)  per-lane partial sums, rows = [ce*exp(-v), exp(-v), v]
    """
    j = pl.program_id(1)           # pixel-tile index (reduction axis)
    C, TP = pm_ref.shape

    @pl.when(j == 0)
    def _():
        out_ref[...] = jnp.zeros_like(out_ref)

    pm = pm_ref[...].astype(jnp.float32)    # (C, TP)
    pa = pa_ref[...].astype(jnp.float32)    # (C, TP)
    lbl = lbl_ref[...].astype(jnp.int32)    # (1, TP)

    # log-softmax over the channel (sublane) axis, numerically stable.
    m_main = jnp.max(pm, axis=0, keepdims=True)                 # (1, TP)
    e_main = jnp.exp(pm - m_main)
    s_main = jnp.sum(e_main, axis=0, keepdims=True)
    log_p_main = pm - m_main - jnp.log(s_main)                  # (C, TP)

    m_aux = jnp.max(pa, axis=0, keepdims=True)
    e_aux = jnp.exp(pa - m_aux)
    s_aux = jnp.sum(e_aux, axis=0, keepdims=True)
    # softmax(aux) from the already-computed exponentials: one reciprocal +
    # C multiplies instead of C extra exps.
    p_aux = e_aux * (1.0 / s_aux)                               # (C, TP)
    log_p_aux = pa - m_aux - jnp.log(s_aux)                     # (C, TP)

    # KLDivLoss(log_softmax(main), softmax(aux)) summed over channels.
    variance = jnp.sum(p_aux * (log_p_aux - log_p_main), axis=0, keepdims=True)  # (1, TP)

    # Cross entropy via a one-hot gather over the channel (sublane) axis.
    # TODO(synk): PyTorch CrossEntropyLoss ignore_index=-100 semantics are not
    # reproduced; labels are assumed to lie in [0, C).
    ch = jax.lax.broadcasted_iota(jnp.int32, (C, TP), 0)
    onehot = (ch == lbl).astype(jnp.float32)
    ce = -jnp.sum(onehot * log_p_main, axis=0, keepdims=True)   # (1, TP)

    ev = jnp.exp(-variance)                                     # (1, TP)

    # Mask the ragged pixel tail; out-of-bounds lanes hold unspecified data
    # (possibly non-finite), so use where-select rather than multiply-by-mask.
    lane = jax.lax.broadcasted_iota(jnp.int32, (1, TP), 1) + j * TP
    valid = lane < n_pixels

    out_ref[0:1, :] += jnp.where(valid, ce * ev, 0.0)
    out_ref[1:2, :] += jnp.where(valid, ev, 0.0)
    out_ref[2:3, :] += jnp.where(valid, variance, 0.0)


def kl_ce_loss(pred_main, pred_aux, label, *, tp=32768):
    """pred_main, pred_aux: [B, C, H, W] logits; label: [B, 1, H, W] class ids."""
    B, C, H, W = pred_main.shape
    P = H * W          # pixels per batch element
    N = B * P          # total pixels (for variance.mean())

    # Lane tile: multiple of 128, capped at `tp`, no larger than needed.
    TP = min(int(tp), pl.cdiv(P, 128) * 128)

    # Free reshapes only -- no transpose, no pad, no dtype copy of the logits.
    pm = pred_main.reshape(B, C, P)
    pa = pred_aux.reshape(B, C, P)
    lbl = label.reshape(B, 1, P).astype(jnp.int32)

    grid = (B, pl.cdiv(P, TP))
    kernel = functools.partial(kl_ce_kernel, n_pixels=P)

    partials = pl.pallas_call(
        kernel,
        out_shape=jax.ShapeDtypeStruct((B, 3, TP), jnp.float32),
        grid_spec=pltpu.PrefetchScalarGridSpec(
            num_scalar_prefetch=0,
            grid=grid,
            in_specs=[
                pl.BlockSpec((None, C, TP), lambda b, j: (b, 0, j)),
                pl.BlockSpec((None, C, TP), lambda b, j: (b, 0, j)),
                pl.BlockSpec((None, 1, TP), lambda b, j: (b, 0, j)),
            ],
            out_specs=pl.BlockSpec((None, 3, TP), lambda b, j: (b, 0, 0)),
        ),
        compiler_params=pltpu.CompilerParams(
            dimension_semantics=("parallel", "arbitrary")),
    )(pm, pa, lbl)

    # Tiny final reduction + scalar glue in plain JAX.
    sums = jnp.sum(partials, axis=(0, 2))          # [sum(ce*ev), sum(ev), sum(v)]
    return sums[0] / sums[1] + sums[2] / N


def kl_ce_loss_ref(pred_main, pred_aux, label):
    """Pure-JAX reference mirroring the PyTorch forward."""
    lsm_main = jax.nn.log_softmax(pred_main.astype(jnp.float32), axis=1)
    lsm_aux = jax.nn.log_softmax(pred_aux.astype(jnp.float32), axis=1)
    p_aux = jnp.exp(lsm_aux)
    variance = jnp.sum(p_aux * (lsm_aux - lsm_main), axis=1)            # (B, H, W)
    lbl = label[:, 0].astype(jnp.int32)                                 # (B, H, W)
    ce = -jnp.take_along_axis(lsm_main, lbl[:, None], axis=1)[:, 0]     # (B, H, W)
    ev = jnp.exp(-variance)
    return (ce * ev).sum() / ev.sum() + variance.mean()


if __name__ == "__main__":
    key = jax.random.PRNGKey(0)
    k1, k2, k3 = jax.random.split(key, 3)

    B, C, H, W = 2, 4, 16, 16
    pred_main = jax.random.normal(k1, (B, C, H, W), dtype=jnp.float32)
    pred_aux = jax.random.normal(k2, (B, C, H, W), dtype=jnp.float32)
    label = jax.random.randint(k3, (B, 1, H, W), 0, C, dtype=jnp.int32)

    loss = jax.block_until_ready(kl_ce_loss(pred_main, pred_aux, label))
    ref = jax.block_until_ready(kl_ce_loss_ref(pred_main, pred_aux, label))

    assert jnp.isfinite(loss), "non-finite loss"
    assert jnp.allclose(loss, ref, rtol=1e-4, atol=1e-5), (loss, ref)
    print("KERNEL_OK")
</pallas_src>

<mosaic_0001>
module attributes {stable_mosaic.version = 11 : i64} {
  func.func @kl_ce_kernel(%arg0: i32, %arg1: i32, %arg2: memref<1x4x256xf32, #tpu.memory_space<vmem>>, %arg3: memref<1x4x256xf32, #tpu.memory_space<vmem>>, %arg4: memref<1x1x256xi32, #tpu.memory_space<vmem>>, %arg5: memref<1x3x256xf32, #tpu.memory_space<vmem>>) attributes {dimension_semantics = [#tpu.dimension_semantics<parallel>, #tpu.dimension_semantics<arbitrary>], iteration_bounds = array<i64: 2, 1>, scalar_prefetch = 0 : i64, scratch_operands = 0 : i64, tpu.core_type = #tpu.core_type<tc>, window_params = [{transform_indices = @transform_0, window_bounds = array<i64: 1, 4, 256>}, {transform_indices = @transform_1, window_bounds = array<i64: 1, 4, 256>}, {transform_indices = @transform_2, window_bounds = array<i64: 1, 1, 256>}, {transform_indices = @transform_3, window_bounds = array<i64: 1, 3, 256>}]} {
    %c0_i32 = arith.constant 0 : i32
    %0 = arith.cmpi eq, %arg1, %c0_i32 : i32
    %1 = arith.extui %0 : i1 to i32
    %c0_i32_0 = arith.constant 0 : i32
    %2 = arith.cmpi ne, %1, %c0_i32_0 : i32
    scf.if %2 {
      %cst_37 = arith.constant 0.000000e+00 : f32
      %85 = vector.broadcast %cst_37 : f32 to vector<3x256xf32>
      %c0_38 = arith.constant 0 : index
      %c0_39 = arith.constant 0 : index
      %c0_40 = arith.constant 0 : index
      %86 = vector.load %arg5[%c0_38, %c0_39, %c0_40] : memref<1x3x256xf32, #tpu.memory_space<vmem>>, vector<1x3x256xf32>
      %87 = vector.shape_cast %86 : vector<1x3x256xf32> to vector<3x256xf32>
      %88 = vector.shape_cast %85 : vector<3x256xf32> to vector<1x3x256xf32>
      tpu.vector_store %arg5[%c0_38, %c0_39, %c0_40], %88 {strides = array<i32>} : memref<1x3x256xf32, #tpu.memory_space<vmem>>, vector<1x3x256xf32>,
    } else {
    }
    %c0 = arith.constant 0 : index
    %c0_1 = arith.constant 0 : index
    %c0_2 = arith.constant 0 : index
    %3 = vector.load %arg2[%c0, %c0_1, %c0_2] : memref<1x4x256xf32, #tpu.memory_space<vmem>>, vector<1x4x256xf32>
    %4 = vector.shape_cast %3 : vector<1x4x256xf32> to vector<4x256xf32>
    %c0_3 = arith.constant 0 : index
    %c0_4 = arith.constant 0 : index
    %c0_5 = arith.constant 0 : index
    %5 = vector.load %arg3[%c0_3, %c0_4, %c0_5] : memref<1x4x256xf32, #tpu.memory_space<vmem>>, vector<1x4x256xf32>
    %6 = vector.shape_cast %5 : vector<1x4x256xf32> to vector<4x256xf32>
    %c0_6 = arith.constant 0 : index
    %c0_7 = arith.constant 0 : index
    %c0_8 = arith.constant 0 : index
    %7 = vector.load %arg4[%c0_6, %c0_7, %c0_8] : memref<1x1x256xi32, #tpu.memory_space<vmem>>, vector<1x1x256xi32>
    %8 = vector.shape_cast %7 : vector<1x1x256xi32> to vector<1x256xi32>
    %cst = arith.constant dense<0xFF800000> : vector<256xf32>
    %9 = vector.multi_reduction <maximumf>, %4, %cst [0] : vector<4x256xf32> to vector<256xf32>
    %10 = vector.shape_cast %9 : vector<256xf32> to vector<1x256xf32>
    %11 = vector.broadcast %10 : vector<1x256xf32> to vector<4x256xf32>
    %12 = arith.subf %4, %11 : vector<4x256xf32>
    %13 = math.exp %12 : vector<4x256xf32>
    %cst_9 = arith.constant dense<0.000000e+00> : vector<256xf32>
    %14 = vector.multi_reduction <add>, %13, %cst_9 [0] : vector<4x256xf32> to vector<256xf32>
    %15 = vector.shape_cast %14 : vector<256xf32> to vector<1x256xf32>
    %16 = vector.broadcast %10 : vector<1x256xf32> to vector<4x256xf32>
    %17 = arith.subf %4, %16 : vector<4x256xf32>
    %18 = math.log %15 : vector<1x256xf32>
    %19 = vector.broadcast %18 : vector<1x256xf32> to vector<4x256xf32>
    %20 = arith.subf %17, %19 : vector<4x256xf32>
    %cst_10 = arith.constant dense<0xFF800000> : vector<256xf32>
    %21 = vector.multi_reduction <maximumf>, %6, %cst_10 [0] : vector<4x256xf32> to vector<256xf32>
    %22 = vector.shape_cast %21 : vector<256xf32> to vector<1x256xf32>
    %23 = vector.broadcast %22 : vector<1x256xf32> to vector<4x256xf32>
    %24 = arith.subf %6, %23 : vector<4x256xf32>
    %25 = math.exp %24 : vector<4x256xf32>
    %cst_11 = arith.constant dense<0.000000e+00> : vector<256xf32>
    %26 = vector.multi_reduction <add>, %25, %cst_11 [0] : vector<4x256xf32> to vector<256xf32>
    %27 = vector.shape_cast %26 : vector<256xf32> to vector<1x256xf32>
    %cst_12 = arith.constant 1.000000e+00 : f32
    %28 = vector.broadcast %cst_12 : f32 to vector<1x256xf32>
    %29 = arith.divf %28, %27 : vector<1x256xf32>
    %30 = vector.broadcast %29 : vector<1x256xf32> to vector<4x256xf32>
    %31 = arith.mulf %25, %30 : vector<4x256xf32>
    %32 = vector.broadcast %22 : vector<1x256xf32> to vector<4x256xf32>
    %33 = arith.subf %6, %32 : vector<4x256xf32>
    %34 = math.log %27 : vector<1x256xf32>
    %35 = vector.broadcast %34 : vector<1x256xf32> to vector<4x256xf32>
    %36 = arith.subf %33, %35 : vector<4x256xf32>
    %37 = arith.subf %36, %20 : vector<4x256xf32>
    %38 = arith.mulf %31, %37 : vector<4x256xf32>
    %cst_13 = arith.constant dense<0.000000e+00> : vector<256xf32>
    %39 = vector.multi_reduction <add>, %38, %cst_13 [0] : vector<4x256xf32> to vector<256xf32>
    %40 = vector.shape_cast %39 : vector<256xf32> to vector<1x256xf32>
    %41 = tpu.iota {dimensions = array<i32: 0>} : vector<4x256xi32>
    %42 = vector.broadcast %8 : vector<1x256xi32> to vector<4x256xi32>
    %43 = arith.cmpi eq, %41, %42 : vector<4x256xi32>
    %44 = arith.extui %43 : vector<4x256xi1> to vector<4x256xi32>
    %45 = arith.sitofp %44 : vector<4x256xi32> to vector<4x256xf32>
    %46 = arith.mulf %45, %20 : vector<4x256xf32>
    %cst_14 = arith.constant dense<0.000000e+00> : vector<256xf32>
    %47 = vector.multi_reduction <add>, %46, %cst_14 [0] : vector<4x256xf32> to vector<256xf32>
    %48 = vector.shape_cast %47 : vector<256xf32> to vector<1x256xf32>
    %cst_15 = arith.constant 0.000000e+00 : f32
    %49 = vector.broadcast %cst_15 : f32 to vector<1x256xf32>
    %50 = arith.subf %49, %48 : vector<1x256xf32>
    %cst_16 = arith.constant 0.000000e+00 : f32
    %51 = vector.broadcast %cst_16 : f32 to vector<1x256xf32>
    %52 = arith.subf %51, %40 : vector<1x256xf32>
    %53 = math.exp %52 : vector<1x256xf32>
    %54 = tpu.iota {dimensions = array<i32: 1>} : vector<1x256xi32>
    %c256_i32 = arith.constant 256 : i32
    %55 = arith.muli %arg1, %c256_i32 : i32
    %56 = vector.broadcast %55 : i32 to vector<1x256xi32>
    %57 = arith.addi %54, %56 : vector<1x256xi32>
    %c256_i32_17 = arith.constant 256 : i32
    %58 = vector.broadcast %c256_i32_17 : i32 to vector<1x256xi32>
    %59 = arith.cmpi slt, %57, %58 : vector<1x256xi32>
    %c0_18 = arith.constant 0 : index
    %c0_19 = arith.constant 0 : index
    %c0_20 = arith.constant 0 : index
    %60 = vector.load %arg5[%c0_18, %c0_19, %c0_20] : memref<1x3x256xf32, #tpu.memory_space<vmem>>, vector<1x1x256xf32>
    %61 = vector.shape_cast %60 : vector<1x1x256xf32> to vector<1x256xf32>
    %62 = arith.mulf %50, %53 : vector<1x256xf32>
    %cst_21 = arith.constant 0.000000e+00 : f32
    %63 = vector.broadcast %cst_21 : f32 to vector<1x256xf32>
    %64 = arith.select %59, %62, %63 : vector<1x256xi1>, vector<1x256xf32>
    %65 = arith.addf %61, %64 : vector<1x256xf32>
    %c0_22 = arith.constant 0 : index
    %c0_23 = arith.constant 0 : index
    %c0_24 = arith.constant 0 : index
    %66 = vector.load %arg5[%c0_22, %c0_23, %c0_24] : memref<1x3x256xf32, #tpu.memory_space<vmem>>, vector<1x1x256xf32>
    %67 = vector.shape_cast %66 : vector<1x1x256xf32> to vector<1x256xf32>
    %68 = vector.shape_cast %65 : vector<1x256xf32> to vector<1x1x256xf32>
    tpu.vector_store %arg5[%c0_22, %c0_23, %c0_24], %68 {strides = array<i32>} : memref<1x3x256xf32, #tpu.memory_space<vmem>>, vector<1x1x256xf32>,
    %c0_25 = arith.constant 0 : index
    %c1 = arith.constant 1 : index
    %c0_26 = arith.constant 0 : index
    %69 = vector.load %arg5[%c0_25, %c1, %c0_26] : memref<1x3x256xf32, #tpu.memory_space<vmem>>, vector<1x1x256xf32>
    %70 = vector.shape_cast %69 : vector<1x1x256xf32> to vector<1x256xf32>
    %cst_27 = arith.constant 0.000000e+00 : f32
    %71 = vector.broadcast %cst_27 : f32 to vector<1x256xf32>
    %72 = arith.select %59, %53, %71 : vector<1x256xi1>, vector<1x256xf32>
    %73 = arith.addf %70, %72 : vector<1x256xf32>
    %c0_28 = arith.constant 0 : index
    %c1_29 = arith.constant 1 : index
    %c0_30 = arith.constant 0 : index
    %74 = vector.load %arg5[%c0_28, %c1_29, %c0_30] : memref<1x3x256xf32, #tpu.memory_space<vmem>>, vector<1x1x256xf32>
    %75 = vector.shape_cast %74 : vector<1x1x256xf32> to vector<1x256xf32>
    %76 = vector.shape_cast %73 : vector<1x256xf32> to vector<1x1x256xf32>
    tpu.vector_store %arg5[%c0_28, %c1_29, %c0_30], %76 {strides = array<i32>} : memref<1x3x256xf32, #tpu.memory_space<vmem>>, vector<1x1x256xf32>,
    %c0_31 = arith.constant 0 : index
    %c2 = arith.constant 2 : index
    %c0_32 = arith.constant 0 : index
    %77 = vector.load %arg5[%c0_31, %c2, %c0_32] : memref<1x3x256xf32, #tpu.memory_space<vmem>>, vector<1x1x256xf32>
    %78 = vector.shape_cast %77 : vector<1x1x256xf32> to vector<1x256xf32>
    %cst_33 = arith.constant 0.000000e+00 : f32
    %79 = vector.broadcast %cst_33 : f32 to vector<1x256xf32>
    %80 = arith.select %59, %40, %79 : vector<1x256xi1>, vector<1x256xf32>
    %81 = arith.addf %78, %80 : vector<1x256xf32>
    %c0_34 = arith.constant 0 : index
    %c2_35 = arith.constant 2 : index
    %c0_36 = arith.constant 0 : index
    %82 = vector.load %arg5[%c0_34, %c2_35, %c0_36] : memref<1x3x256xf32, #tpu.memory_space<vmem>>, vector<1x1x256xf32>
    %83 = vector.shape_cast %82 : vector<1x1x256xf32> to vector<1x256xf32>
    %84 = vector.shape_cast %81 : vector<1x256xf32> to vector<1x1x256xf32>
    tpu.vector_store %arg5[%c0_34, %c2_35, %c0_36], %84 {strides = array<i32>} : memref<1x3x256xf32, #tpu.memory_space<vmem>>, vector<1x1x256xf32>,
    return
  }
  func.func @transform_0(%arg0: i32, %arg1: i32) -> (i32, i32, i32) {
    %c0_i32 = arith.constant 0 : i32
    %c0_i32_0 = arith.constant 0 : i32
    return %arg0, %c0_i32, %arg1 : i32, i32, i32
  }
  func.func @transform_1(%arg0: i32, %arg1: i32) -> (i32, i32, i32) {
    %c0_i32 = arith.constant 0 : i32
    %c0_i32_0 = arith.constant 0 : i32
    return %arg0, %c0_i32, %arg1 : i32, i32, i32
  }
  func.func @transform_2(%arg0: i32, %arg1: i32) -> (i32, i32, i32) {
    %c0_i32 = arith.constant 0 : i32
    %c0_i32_0 = arith.constant 0 : i32
    return %arg0, %c0_i32, %arg1 : i32, i32, i32
  }
  func.func @transform_3(%arg0: i32, %arg1: i32) -> (i32, i32, i32) {
    %c0_i32 = arith.constant 0 : i32
    %c0_i32_0 = arith.constant 0 : i32
    %c0_i32_1 = arith.constant 0 : i32
    return %arg0, %c0_i32, %c0_i32_0 : i32, i32, i32
  }
}

</mosaic_0001>

<llo_original>
// kernel: tpu_custom_call.1
$region0: #{tpu_custom_call.1}
  #allocation0 [shape = 'u32[]', space=smem, size = 0x4, offset = 0x4, fixed_abs, tag = 'smem constant byte address 0x4 - core index']
  #allocation1 [shape = 'u32[144,128]{1,0:T(1,128)}', space=vmem, size = 0x12000, scoped, tag = 'internal scratch']
  %s0 = inlined_call_operand.hbm [shape: f32[2,4,256], index: 0, kind: input, shape index: {}]
  %s1 = inlined_call_operand.hbm [shape: f32[2,4,256], index: 1, kind: input, shape index: {}]
  %s2 = inlined_call_operand.vmem [shape: s32[2,1,256], index: 2, kind: input, shape index: {}]
  %s3 = inlined_call_operand.vmem [shape: f32[2,3,256], index: 3, kind: output, shape index: {}]
  %s4 = sld [smem:[#allocation0]]
  $region57: #{tpu_custom_call.1} parent=0
    _
  %s6 = ssub.s32 1, %s4
  %s7 = scalar_select 0, %s6, %s4
  $region1: #{tpu_custom_call.1} parent=0
    #allocation2 [shape = 'u8[8192]{0}', space=vmem, size = 0x2000, scoped, tag = 'input window, operand 0']
    #allocation3 [shape = 's32[2]{0}', space=sflag, size = 0x8, scoped, tag = 'scoped memory for tpu_custom_call.1']
    #allocation4 [shape = 'u8[8192]{0}', space=vmem, size = 0x2000, scoped, tag = 'input window, operand 1']
    #allocation5 [shape = 's32[2]{0}', space=sflag, size = 0x8, scoped, tag = 'scoped memory for tpu_custom_call.1']
    %8 = vsyncpa [#allocation3], 0
    %s9 = scalar_lea.sflag [#allocation3], 1
    %10 = vsyncpa %s9, 0
    %11 = vsyncpa [#allocation5], 0
    %s12 = scalar_lea.sflag [#allocation5], 1
    %13 = vsyncpa %s12, 0
    loop: start=0, step=1, limit=4
    $region2: #{tpu_custom_call.1} parent=1 // loop_pre_header
      _
    $region3: #{tpu_custom_call.1} parent=1 // loop_header
      %s15 = sphi 0, %s19
      %p16 = scmp.ge.s32.totalorder %s15, 4
      %s22 = sphi 0, %s34
      %s23 = sphi 0, %s30
      %s24 = sphi 0, %s22
      %s25 = sphi 0, %s23
      %s26 = sphi 0, %s24
      %s27 = sphi 0, %s25
      %s39 = sphi 0, %s41
      %s42 = sphi 0, %s39
      %s43 = sphi 0, %s42
      %s59 = sphi 0, %s43
      %s67 = sphi 0, %s69
      %s70 = sphi 0, %s67
      %s71 = sphi 0, %s70
      %s87 = sphi 0, %s71
      %s95 = sphi 0, %s97
      %s98 = sphi 0, %s95
      %s99 = sphi 0, %s98
      %s115 = sphi 0, %s99
      %s121 = sphi 0, %s123
      %s124 = sphi 0, %s121
      %s125 = sphi 0, %s124
      %s141 = sphi 0, %s125
    $region4: #{tpu_custom_call.1} parent=1 // loop_header_branch
      %18 = sbr.rel (%p16) target = $region8
    $region5: #{tpu_custom_call.1} parent=1 // loop_body
      %s20 = ssub.s32 %s15, 1
      %s21 = ssub.s32 %s15, 2
      %s28 = sadd.s32 1, %s23
      %p29 = scmp.ge.s32.totalorder %s28, 1
      %s30 = scalar_select %p29, 0, %s28
      %s31 = sadd.s32 1, %s22
      %s32 = scalar_select %p29, %s31, %s22
      %p33 = scmp.ge.s32.totalorder %s32, 2
      %s34 = scalar_select %p33, 0, %s32
      %s35 = ssub.s32 %s22, %s34
      %s36 = ssub.s32 %s23, %s30
      %s37 = sor.u32 %s35, %s36
      %p38 = scmp.eq.s32.totalorder %s37, 0
      %s40 = sadd.s32 %s39, 1
      %s41 = scalar_select %p38, %s39, %s40
      %p44 = pneg %p38
      %p45 = scmp.eq.s32.totalorder %s15, 1
      %p46 = por %p44, %p45
      %p47 = scmp.ne.s32.totalorder %s39, %s42
      %p48 = scmp.eq.s32.totalorder %s15, 0
      %p49 = por %p47, %p48
      %p50 = scmp.ne.s32.totalorder %s39, %s42
      %p51 = scmp.eq.s32.totalorder %s20, 1
      %p52 = por %p50, %p51
      %p53 = scmp.ne.s32.totalorder %s42, %s43
      %p54 = scmp.eq.s32.totalorder %s20, 0
      %p55 = por %p53, %p54
      %p56 = scmp.ne.s32.totalorder %s42, %s43
      %p57 = scmp.eq.s32.totalorder %s21, 1
      %p58 = por %p56, %p57
      %p60 = scmp.ne.s32.totalorder %s43, %s59
      %p61 = scmp.eq.s32.totalorder %s21, 0
      %p62 = por %p60, %p61
      %s63 = ssub.s32 %s22, %s34
      %s64 = ssub.s32 %s23, %s30
      %s65 = sor.u32 %s63, %s64
      %p66 = scmp.eq.s32.totalorder %s65, 0
      %s68 = sadd.s32 %s67, 1
      %s69 = scalar_select %p66, %s67, %s68
      %p72 = pneg %p66
      %p73 = scmp.eq.s32.totalorder %s15, 1
      %p74 = por %p72, %p73
      %p75 = scmp.ne.s32.totalorder %s67, %s70
      %p76 = scmp.eq.s32.totalorder %s15, 0
      %p77 = por %p75, %p76
      %p78 = scmp.ne.s32.totalorder %s67, %s70
      %p79 = scmp.eq.s32.totalorder %s20, 1
      %p80 = por %p78, %p79
      %p81 = scmp.ne.s32.totalorder %s70, %s71
      %p82 = scmp.eq.s32.totalorder %s20, 0
      %p83 = por %p81, %p82
      %p84 = scmp.ne.s32.totalorder %s70, %s71
      %p85 = scmp.eq.s32.totalorder %s21, 1
      %p86 = por %p84, %p85
      %p88 = scmp.ne.s32.totalorder %s71, %s87
      %p89 = scmp.eq.s32.totalorder %s21, 0
      %p90 = por %p88, %p89
      %s91 = ssub.s32 %s22, %s34
      %s92 = ssub.s32 %s23, %s30
      %s93 = sor.u32 %s91, %s92
      %p94 = scmp.eq.s32.totalorder %s93, 0
      %s96 = sadd.s32 %s95, 1
      %s97 = scalar_select %p94, %s95, %s96
      %p100 = pneg %p94
      %p101 = scmp.eq.s32.totalorder %s15, 1
      %p102 = por %p100, %p101
      %p103 = scmp.ne.s32.totalorder %s95, %s98
      %p104 = scmp.eq.s32.totalorder %s15, 0
      %p105 = por %p103, %p104
      %p106 = scmp.ne.s32.totalorder %s95, %s98
      %p107 = scmp.eq.s32.totalorder %s20, 1
      %p108 = por %p106, %p107
      %p109 = scmp.ne.s32.totalorder %s98, %s99
      %p110 = scmp.eq.s32.totalorder %s20, 0
      %p111 = por %p109, %p110
      %p112 = scmp.ne.s32.totalorder %s98, %s99
      %p113 = scmp.eq.s32.totalorder %s21, 1
      %p114 = por %p112, %p113
      %p116 = scmp.ne.s32.totalorder %s99, %s115
      %p117 = scmp.eq.s32.totalorder %s21, 0
      %p118 = por %p116, %p117
      %s119 = ssub.s32 %s22, %s34
      %p120 = scmp.eq.s32.totalorder %s119, 0
      %s122 = sadd.s32 %s121, 1
      %s123 = scalar_select %p120, %s121, %s122
      %p126 = pneg %p120
      %p127 = scmp.eq.s32.totalorder %s15, 1
      %p128 = por %p126, %p127
      %p129 = scmp.ne.s32.totalorder %s121, %s124
      %p130 = scmp.eq.s32.totalorder %s15, 0
      %p131 = por %p129, %p130
      %p132 = scmp.ne.s32.totalorder %s121, %s124
      %p133 = scmp.eq.s32.totalorder %s20, 1
      %p134 = por %p132, %p133
      %p135 = scmp.ne.s32.totalorder %s124, %s125
      %p136 = scmp.eq.s32.totalorder %s20, 0
      %p137 = por %p135, %p136
      %p138 = scmp.ne.s32.totalorder %s124, %s125
      %p139 = scmp.eq.s32.totalorder %s21, 1
      %p140 = por %p138, %p139
      %p142 = scmp.ne.s32.totalorder %s125, %s141
      %p143 = scmp.eq.s32.totalorder %s21, 0
      %p144 = por %p142, %p143
      %p145 = scmp.le.s32.totalorder 1, %s15
      %p146 = scmp.lt.s32.totalorder %s15, 3
      %p147 = pnand %p145, %p146
      %p148 = pneg %p147
      // Predicated region
      $region9: #{tpu_custom_call.1} parent=5 // pred_check
        _
      $region10: #{tpu_custom_call.1} parent=5 // pred_check_branch
        %150 = sbr.rel (%p147) target = $region12
      $region11: #{tpu_custom_call.1} parent=5 // pred_region
        %s151 = ssub.s32 %s15, 1
      $region12: #{tpu_custom_call.1} parent=5 // pred_fallthru
        _
      %p152 = scmp.lt.s32.totalorder %s15, 2
      // Predicated region
      $region13: #{tpu_custom_call.1} parent=5 // pred_check
        %p153 = pneg %p152
      $region14: #{tpu_custom_call.1} parent=5 // pred_check_branch
        %155 = sbr.rel (%p153) target = $region16
      $region15: #{tpu_custom_call.1} parent=5 // pred_region
        // Predicated region
        $region17: #{tpu_custom_call.1} parent=15 // pred_check
          %p156 = pneg %p49
        $region18: #{tpu_custom_call.1} parent=15 // pred_check_branch
          %158 = sbr.rel (%p156) target = $region20
        $region19: #{tpu_custom_call.1} parent=15 // pred_region
          %s159 = sand.u32 %s39, 1
          %s160 = scalar_lea.sflag [#allocation3], %s159
          %s161 = sand.u32 %s39, 1
          %s162 = smul.addr %s161, 8
          %s163 = scalar_lea.vmem [#allocation2], %s162
          %s164 = smul.u32 2, %s23
          %s166 = ssub.s32 128, 128
          %167 = vsyncadd %s160, %s166
          %s168 = smul.addr %s22, 2
          %s169 = sadd.s32 %s164, %s168
          %s170 = smul.addr %s169, 64
          %s171 = scalar_lea.hbm %s0, %s170
          %s173 = sshll.u32 %s163, 4
          %s174 = int_to_ptr.vmem [resolvable:$true] %s173
          %176 = dma.hbm_to_vmem [thread:$0]  %s171, 128, %s174, %s160
        $region20: #{tpu_custom_call.1} parent=15 // pred_fallthru
          _
        // Predicated region
        $region21: #{tpu_custom_call.1} parent=15 // pred_check
          %p177 = pneg %p77
        $region22: #{tpu_custom_call.1} parent=15 // pred_check_branch
          %179 = sbr.rel (%p177) target = $region24
        $region23: #{tpu_custom_call.1} parent=15 // pred_region
          %s180 = sand.u32 %s67, 1
          %s181 = scalar_lea.sflag [#allocation5], %s180
          %s182 = sand.u32 %s67, 1
          %s183 = smul.addr %s182, 8
          %s184 = scalar_lea.vmem [#allocation4], %s183
          %s185 = smul.u32 2, %s23
          %s187 = ssub.s32 128, 128
          %188 = vsyncadd %s181, %s187
          %s189 = smul.addr %s22, 2
          %s190 = sadd.s32 %s185, %s189
          %s191 = smul.addr %s190, 64
          %s192 = scalar_lea.hbm %s1, %s191
          %s194 = sshll.u32 %s184, 4
          %s195 = int_to_ptr.vmem [resolvable:$true] %s194
          %197 = dma.hbm_to_vmem [thread:$0]  %s192, 128, %s195, %s181
        $region24: #{tpu_custom_call.1} parent=15 // pred_fallthru
          _
        // Predicated region
        $region25: #{tpu_custom_call.1} parent=15 // pred_check
          %p198 = pneg %p105
        $region26: #{tpu_custom_call.1} parent=15 // pred_check_branch
          %200 = sbr.rel (%p198) target = $region28
        $region27: #{tpu_custom_call.1} parent=15 // pred_region
          %s201 = smul.u32 2, %s23
          %p202 = scmp.lt.s32.totalorder %s22, 1
          %s203 = scalar_select %p202, %s22, 1
          %p204 = scmp.lt.s32.totalorder %s201, 1
          %s205 = scalar_select %p204, %s201, 1
          %s206 = smul.addr %s203, 2
          %s207 = sadd.s32 %s205, %s206
          %s208 = scalar_lea.vmem %s2, %s207
          %s209 = smul.u32 2, %s23
        $region28: #{tpu_custom_call.1} parent=15 // pred_fallthru
          _
      $region16: #{tpu_custom_call.1} parent=5 // pred_fallthru
        _
      %p210 = scmp.le.s32.totalorder 1, %s15
      %p211 = scmp.lt.s32.totalorder %s15, 3
      %p212 = pnand %p210, %p211
      %p213 = pneg %p212
      // Predicated region
      $region29: #{tpu_custom_call.1} parent=5 // pred_check
        _
      $region30: #{tpu_custom_call.1} parent=5 // pred_check_branch
        %215 = sbr.rel (%p212) target = $region32
      $region31: #{tpu_custom_call.1} parent=5 // pred_region
        %s216 = ssub.s32 %s15, 1
        %s217 = sand.u32 %s42, 1
        %s218 = scalar_lea.sflag [#allocation3], %s217
        %s219 = sand.u32 %s42, 1
        %s220 = smul.addr %s219, 8
        %s221 = scalar_lea.vmem [#allocation2], %s220
        // Predicated region
        $region33: #{tpu_custom_call.1} parent=31 // pred_check
          %p222 = pneg %p55
        $region34: #{tpu_custom_call.1} parent=31 // pred_check_branch
          %224 = sbr.rel (%p222) target = $region36
        $region35: #{tpu_custom_call.1} parent=31 // pred_region
          %225 = dma.done %s218, 128
        $region36: #{tpu_custom_call.1} parent=31 // pred_fallthru
          _
        %s226 = sand.u32 %s70, 1
        %s227 = scalar_lea.sflag [#allocation5], %s226
        %s228 = sand.u32 %s70, 1
        %s229 = smul.addr %s228, 8
        %s230 = scalar_lea.vmem [#allocation4], %s229
        // Predicated region
        $region37: #{tpu_custom_call.1} parent=31 // pred_check
          %p231 = pneg %p83
        $region38: #{tpu_custom_call.1} parent=31 // pred_check_branch
          %233 = sbr.rel (%p231) target = $region40
        $region39: #{tpu_custom_call.1} parent=31 // pred_region
          %234 = dma.done %s227, 128
        $region40: #{tpu_custom_call.1} parent=31 // pred_fallthru
          _
        %s235 = sand.u32 %s42, 1
        %s236 = scalar_lea.sflag [#allocation3], %s235
        %s237 = sand.u32 %s42, 1
        %s238 = smul.addr %s237, 8
        %s239 = scalar_lea.vmem [#allocation2], %s238
        %p240 = pneg %p55
        %p241 = pneg %p52
        %s242 = sand.u32 %s70, 1
        %s243 = scalar_lea.sflag [#allocation5], %s242
        %s244 = sand.u32 %s70, 1
        %s245 = smul.addr %s244, 8
        %s246 = scalar_lea.vmem [#allocation4], %s245
        %p247 = pneg %p83
        %p248 = pneg %p80
        %s249 = smul.u32 2, %s25
        %p250 = scmp.lt.s32.totalorder %s24, 1
        %s251 = scalar_select %p250, %s24, 1
        %p252 = scmp.lt.s32.totalorder %s249, 1
        %s253 = scalar_select %p252, %s249, 1
        %s254 = smul.addr %s251, 2
        %s255 = sadd.s32 %s253, %s254
        %s256 = scalar_lea.vmem %s2, %s255
        %p257 = pneg %p111
        %p258 = pneg %p108
        %p259 = pneg %p137
        %p260 = pneg %p134
        %p261 = scmp.lt.s32.totalorder %s24, 1
        %s262 = scalar_select %p261, %s24, 1
        %s263 = smul.addr %s262, 2
        %s264 = smul.addr %s263, 4
        %s265 = scalar_lea.vmem %s3, %s264
        %s266 = smul.u32 2, %s25
        %s267 = smul.u32 2, %s25
        %s268 = smul.u32 2, %s25
        %p269 = scmp.lt.s32.totalorder %s24, 1
        %s270 = scalar_select %p269, %s24, 1
        %p271 = scmp.lt.s32.totalorder %s268, 1
        %s272 = scalar_select %p271, %s268, 1
        %s273 = smul.addr %s270, 2
        %s274 = sadd.s32 %s272, %s273
        %s275 = scalar_lea.vmem %s2, %s274
        %s276 = smul.u32 2, %s25
        %p277 = scmp.lt.s32.totalorder %s24, 1
        %s278 = scalar_select %p277, %s24, 1
        %s279 = smul.addr %s278, 2
        %s280 = smul.addr %s279, 4
        %s281 = scalar_lea.vmem %s3, %s280
        %p282 = scmp.eq.s32.totalorder %s25, 0
        // Predicated region
        $region41: #{tpu_custom_call.1} parent=31 // pred_check
          %p283 = pneg %p282
        $region42: #{tpu_custom_call.1} parent=31 // pred_check_branch
          %285 = sbr.rel (%p283) target = $region44
        $region43: #{tpu_custom_call.1} parent=31 // pred_region
          %286 = vst [vmem:[%s281] sm:$0x77] 0.0
        $region44: #{tpu_custom_call.1} parent=31 // pred_fallthru
          _
        %v287 = vld [vmem:[%s221] sm:$0xff]
        %v288 = vld [vmem:[%s230] sm:$0xff]
        %v289 = vld [vmem:[%s275] sm:$0x3]
        %v291 = vcombine.high %v287, %v287
        %vm293 = vcmask 1043456
        %v294 = vsel %vm293, %v287, -inf
        %v295 = vrot.slane %v294, 4
        %v296 = vmax.f32 %v294, %v295
        %v297 = vrot.slane %v296, 2
        %v298 = vmax.f32 %v296, %v297
        %v299 = vrot.slane %v298, 1
        %v300 = vmax.f32 %v298, %v299
        %v301 = vsel %vm293, %v291, -inf
        %v302 = vrot.slane %v301, 4
        %v303 = vmax.f32 %v301, %v302
        %v304 = vrot.slane %v303, 2
        %v305 = vmax.f32 %v303, %v304
        %v306 = vrot.slane %v305, 1
        %v307 = vmax.f32 %v305, %v306
        %v310 = vcombine.low %v300, %v307
        %v312 = vsub.f32 %v287, %v310
        %v313 = vmul.f32 %v312, 1.442695
        %v314 = vpow.pop %v313
        %v316 = vcombine.high %v314, %v314
        %v318 = vsel %vm293, %v314, 0.0
        %v319 = vrot.slane %v318, 4
        %v320 = vadd.f32 %v318, %v319
        %v321 = vrot.slane %v320, 2
        %v322 = vadd.f32 %v320, %v321
        %v323 = vrot.slane %v322, 1
        %v324 = vadd.f32 %v322, %v323
        %v325 = vsel %vm293, %v316, 0.0
        %v326 = vrot.slane %v325, 4
        %v327 = vadd.f32 %v325, %v326
        %v328 = vrot.slane %v327, 2
        %v329 = vadd.f32 %v327, %v328
        %v330 = vrot.slane %v329, 1
        %v331 = vadd.f32 %v329, %v330
        %v332 = vlog2.pop %v324
        %v333 = vmul.f32 %v332, 0.6931472
        %v334 = vlog2.pop %v331
        %v335 = vmul.f32 %v334, 0.6931472
        %v338 = vcombine.low %v333, %v335
        %v340 = vsub.f32 %v312, %v338
        %v342 = vcombine.high %v288, %v288
        %v344 = vsel %vm293, %v288, -inf
        %v345 = vrot.slane %v344, 4
        %v346 = vmax.f32 %v344, %v345
        %v347 = vrot.slane %v346, 2
        %v348 = vmax.f32 %v346, %v347
        %v349 = vrot.slane %v348, 1
        %v350 = vmax.f32 %v348, %v349
        %v351 = vsel %vm293, %v342, -inf
        %v352 = vrot.slane %v351, 4
        %v353 = vmax.f32 %v351, %v352
        %v354 = vrot.slane %v353, 2
        %v355 = vmax.f32 %v353, %v354
        %v356 = vrot.slane %v355, 1
        %v357 = vmax.f32 %v355, %v356
        %v360 = vcombine.low %v350, %v357
        %v362 = vsub.f32 %v288, %v360
        %v363 = vmul.f32 %v362, 1.442695
        %v364 = vpow.pop %v363
        %v366 = vcombine.high %v364, %v364
        %v368 = vsel %vm293, %v364, 0.0
        %v369 = vrot.slane %v368, 4
        %v370 = vadd.f32 %v368, %v369
        %v371 = vrot.slane %v370, 2
        %v372 = vadd.f32 %v370, %v371
        %v373 = vrot.slane %v372, 1
        %v374 = vadd.f32 %v372, %v373
        %v375 = vsel %vm293, %v366, 0.0
        %v376 = vrot.slane %v375, 4
        %v377 = vadd.f32 %v375, %v376
        %v378 = vrot.slane %v377, 2
        %v379 = vadd.f32 %v377, %v378
        %v380 = vrot.slane %v379, 1
        %v381 = vadd.f32 %v379, %v380
        %v382 = vrcp.pop %v374
        %v383 = vmul.f32 1.0, %v382
        %v384 = vrcp.pop %v381
        %v385 = vmul.f32 1.0, %v384
        %v388 = vcombine.low %v383, %v385
        %v390 = vmul.f32 %v364, %v388
        %v391 = vlog2.pop %v374
        %v392 = vmul.f32 %v391, 0.6931472
        %v393 = vlog2.pop %v381
        %v394 = vmul.f32 %v393, 0.6931472
        %v397 = vcombine.low %v392, %v394
        %v399 = vsub.f32 %v362, %v397
        %v400 = vsub.f32 %v399, %v340
        %v401 = vmul.f32 %v390, %v400
        %v403 = vcombine.high %v401, %v401
        %v405 = vsel %vm293, %v401, 0.0
        %v406 = vrot.slane %v405, 4
        %v407 = vadd.f32 %v405, %v406
        %v408 = vrot.slane %v407, 2
        %v409 = vadd.f32 %v407, %v408
        %v410 = vrot.slane %v409, 1
        %v411 = vadd.f32 %v409, %v410
        %v412 = vsel %vm293, %v403, 0.0
        %v413 = vrot.slane %v412, 4
        %v414 = vadd.f32 %v412, %v413
        %v415 = vrot.slane %v414, 2
        %v416 = vadd.f32 %v414, %v415
        %v417 = vrot.slane %v416, 1
        %v418 = vadd.f32 %v416, %v417
        %v419 = vlaneseq
        %v420 = vshrl.u32 %v419, 7
        %v421 = vlaneseq
        %v422 = vshrl.u32 %v421, 7
        %v423 = vsub.s32 0, %v422
        %v424 = vrot.slane %v289, %v423
        %v425 = vlaneseq
        %v426 = vshrl.u32 %v425, 7
        %v427 = vsub.s32 1, %v426
        %v428 = vrot.slane %v289, %v427
        %vm429 = vcmp.eq.s32.totalorder %v420, %v424
        %vm430 = vcmp.eq.s32.totalorder %v420, %v428
        %v431 = vsel %vm429, 1, 0
        %v432 = vsel %vm430, 1, 0
        %v433 = vcvt.s32.f32 %v431
        %v434 = vcvt.s32.f32 %v432
        %v436 = vcombine.high %v340, %v340
        %v438 = vmul.f32 %v433, %v340
        %v439 = vmul.f32 %v434, %v436
        %v440 = vsel %vm293, %v438, 0.0
        %v441 = vrot.slane %v440, 4
        %v442 = vadd.f32 %v440, %v441
        %v443 = vrot.slane %v442, 2
        %v444 = vadd.f32 %v442, %v443
        %v445 = vrot.slane %v444, 1
        %v446 = vadd.f32 %v444, %v445
        %v447 = vsel %vm293, %v439, 0.0
        %v448 = vrot.slane %v447, 4
        %v449 = vadd.f32 %v447, %v448
        %v450 = vrot.slane %v449, 2
        %v451 = vadd.f32 %v449, %v450
        %v452 = vrot.slane %v451, 1
        %v453 = vadd.f32 %v451, %v452
        %v454 = vsub.f32 0.0, %v446
        %v455 = vsub.f32 0.0, %v453
        %v456 = vsub.f32 0.0, %v411
        %v457 = vsub.f32 0.0, %v418
        %v458 = vmul.f32 %v456, 1.442695
        %v459 = vpow.pop %v458
        %v460 = vmul.f32 %v457, 1.442695
        %v461 = vpow.pop %v460
        %v462 = vlaneseq
        %v463 = vand.u32 %v462, 127
        %v464 = vadd.s32 %v463, 128
        %s465 = smul.u32 %s25, 256
        %v466 = vstv %s465
        %v467 = vadd.s32 %v463, %v466
        %v468 = vadd.s32 %v464, %v466
        %vm469 = vcmp.lt.s32.totalorder %v467, 256
        %vm470 = vcmp.lt.s32.totalorder %v468, 256
        %v471 = vld [vmem:[%s281] ss:$4 sm:$0x3]
        %v472 = vmul.f32 %v454, %v459
        %v473 = vmul.f32 %v455, %v461
        %v474 = vsel %vm469, %v472, 0.0
        %v475 = vsel %vm470, %v473, 0.0
        %v478 = vcombine.low %v474, %v475
        %v480 = vunpack.c.l.s4 1966171168
        %v481 = vunpack.c.0.s8 %v480
        %v482 = vlaneseq
        %v483 = vshrl.u32 %v482, 7
        %v484 = vsub.s32 %v481, %v483
        %v485 = vrot.slane %v478, %v484
        %v487 = vunpack.c.l.s4 1966171168
        %v488 = vunpack.c.0.s8 %v487
        %v489 = vlaneseq
        %v490 = vshrl.u32 %v489, 7
        %v491 = vsub.s32 %v488, %v490
        %v492 = vrot.slane %v485, %v491
        %v494 = vadd.f32 %v471, %v492
        %v495 = vlaneseq
        %vm496 = vcmp.ge.s32.totalorder %v495, 0
        %vm497 = vcmp.lt.s32.totalorder %v495, 256
        %vm498 = vmand %vm496, %vm497
        %499 = vst.msk [vmem:[%s281] ss:$4 sm:$0x3] %vm498, %v494
        %s500 = scalar_lea.vmem %s281, 1
        %v501 = vld [vmem:[%s500] ss:$4 sm:$0x3]
        %v502 = vsel %vm469, %v459, 0.0
        %v503 = vsel %vm470, %v461, 0.0
        %v506 = vcombine.low %v502, %v503
        %v508 = vunpack.c.l.s4 1966171168
        %v509 = vunpack.c.0.s8 %v508
        %v510 = vlaneseq
        %v511 = vshrl.u32 %v510, 7
        %v512 = vsub.s32 %v509, %v511
        %v513 = vrot.slane %v506, %v512
        %v515 = vunpack.c.l.s4 1966171168
        %v516 = vunpack.c.0.s8 %v515
        %v517 = vlaneseq
        %v518 = vshrl.u32 %v517, 7
        %v519 = vsub.s32 %v516, %v518
        %v520 = vrot.slane %v513, %v519
        %v522 = vadd.f32 %v501, %v520
        %523 = vst.msk [vmem:[%s500] ss:$4 sm:$0x3] %vm498, %v522
        %s524 = scalar_lea.vmem %s281, 2
        %v525 = vld [vmem:[%s524] ss:$4 sm:$0x3]
        %v526 = vsel %vm469, %v411, 0.0
        %v527 = vsel %vm470, %v418, 0.0
        %v530 = vcombine.low %v526, %v527
        %v532 = vunpack.c.l.s4 1966171168
        %v533 = vunpack.c.0.s8 %v532
        %v534 = vlaneseq
        %v535 = vshrl.u32 %v534, 7
        %v536 = vsub.s32 %v533, %v535
        %v537 = vrot.slane %v530, %v536
        %v539 = vunpack.c.l.s4 1966171168
        %v540 = vunpack.c.0.s8 %v539
        %v541 = vlaneseq
        %v542 = vshrl.u32 %v541, 7
        %v543 = vsub.s32 %v540, %v542
        %v544 = vrot.slane %v537, %v543
        %v546 = vadd.f32 %v525, %v544
        %547 = vst.msk [vmem:[%s524] ss:$4 sm:$0x3] %vm498, %v546
        %p548 = scmp.lt.s32.totalorder %s24, 1
        %s549 = scalar_select %p548, %s24, 1
        %s550 = smul.addr %s549, 2
        %s551 = smul.addr %s550, 4
        %s552 = scalar_lea.vmem %s3, %s551
        // Predicated region
        $region45: #{tpu_custom_call.1} parent=31 // pred_check
          %p553 = pneg %p134
        $region46: #{tpu_custom_call.1} parent=31 // pred_check_branch
          %555 = sbr.rel (%p553) target = $region48
        $region47: #{tpu_custom_call.1} parent=31 // pred_region
          _
        $region48: #{tpu_custom_call.1} parent=31 // pred_fallthru
          _
      $region32: #{tpu_custom_call.1} parent=5 // pred_fallthru
        _
      %p556 = scmp.le.s32.totalorder 2, %s15
      // Predicated region
      $region49: #{tpu_custom_call.1} parent=5 // pred_check
        %p557 = pneg %p556
      $region50: #{tpu_custom_call.1} parent=5 // pred_check_branch
        %559 = sbr.rel (%p557) target = $region52
      $region51: #{tpu_custom_call.1} parent=5 // pred_region
        %s560 = ssub.s32 %s15, 2
        // Predicated region
        $region53: #{tpu_custom_call.1} parent=51 // pred_check
          %p561 = pneg %p140
        $region54: #{tpu_custom_call.1} parent=51 // pred_check_branch
          %563 = sbr.rel (%p561) target = $region56
        $region55: #{tpu_custom_call.1} parent=51 // pred_region
          %p564 = scmp.lt.s32.totalorder %s26, 1
          %s565 = scalar_select %p564, %s26, 1
          %s566 = smul.addr %s565, 2
          %s567 = smul.addr %s566, 4
          %s568 = scalar_lea.vmem %s3, %s567
        $region56: #{tpu_custom_call.1} parent=51 // pred_fallthru
          _
      $region52: #{tpu_custom_call.1} parent=5 // pred_fallthru
        _
    $region6: #{tpu_custom_call.1} parent=1 // loop_footer
      %s19 = sadd.s32 1, %s15
    $region7: #{tpu_custom_call.1} parent=1 // loop_footer_branch
      %14 = sbr.rel target = $region3
    $region8: #{tpu_custom_call.1} parent=1 // loop_exit
      _
    %569 = vsyncpa [#allocation3], 1
    %s570 = scalar_lea.sflag [#allocation3], 1
    %571 = vsyncpa %s570, 1
    %572 = vsyncpa [#allocation5], 1
    %s573 = scalar_lea.sflag [#allocation5], 1
    %574 = vsyncpa %s573, 1

</llo_original>
